<compile_context>
chip_gen: v7x
topology: tpu7x:2x2x1
jax: 0.10.0
libtpu: 0.0.40
codegen_flags: <defaults>
</compile_context>

<pallas_src>
import functools

import numpy as np
import jax
import jax.numpy as jnp
from jax.experimental import pallas as pl
from jax.experimental.pallas import tpu as pltpu

LANE = 128          # lane width (last dim of every block)
OUT_SUBLANES = 8    # per-core output block: one (8, 128) f32 vreg


def _round_up(x, m):
    return (x + m - 1) // m * m


def _tpu_defaults():
    """(num_cores, max_row_tile, extra_buffering) chosen by TPU generation.

    v7x: 2 TensorCores/chip + 3.2 TB/s HBM -> bigger tiles, 2-way core split,
         3-deep input buffering.  v6e: 1 TC, 1.4 TB/s -> 2048-row tiles.
         v5e / unknown: keep 1024-row tiles and the default scoped VMEM.
    """
    kind = ""
    try:
        kind = (jax.devices()[0].device_kind or "").lower()
    except Exception:
        pass
    if "v7" in kind or "7x" in kind:
        return 2, 4096, True
    if "v6" in kind:
        return 1, 2048, False
    return 1, 1024, False


def _make_in_spec(block_shape, index_map, extra_buffering):
    if extra_buffering:
        # v7x: per-step HBM time (~0.3 us) is close to the fixed per-step
        # overhead, so a 3rd buffer hides DMA-issue latency at step boundaries.
        try:
            return pl.BlockSpec(block_shape, index_map,
                                pipeline_mode=pl.Buffered(3))
        except Exception:
            pass
    return pl.BlockSpec(block_shape, index_map)


def _fold_rows(x):
    """(R, 128) f32 -> (8, 128) by summing groups of 8 rows.

    Layout-preserving sublane-group adds (pure VPU); requires R % 8 == 0.
    """
    r, lane = x.shape
    return x.reshape(r // 8, 8, lane).sum(axis=0)


# ---------------------------------------------------------------------------
# Flat streaming MSE kernel (no / host-side gather).
# ---------------------------------------------------------------------------
def _mse_flat_kernel(pred_ref, gt_ref, out_ref, *, rows, row_tile,
                     tiles_per_core):
    c = pl.program_id(0)   # core / parallel axis
    k = pl.program_id(1)   # reduction axis (arbitrary); out block resident

    @pl.when(k == 0)
    def _():
        out_ref[...] = jnp.zeros_like(out_ref)

    d = pred_ref[...].astype(jnp.float32) - gt_ref[...].astype(jnp.float32)
    sq = d * d

    # UNclamped step offset: clamped / over-provisioned steps get
    # start_row >= rows and therefore take the (fully zeroing) masked branch.
    start_row = (c * tiles_per_core + k) * row_tile

    @pl.when(start_row + row_tile <= rows)          # interior tile: no mask
    def _():
        out_ref[...] += _fold_rows(sq)

    @pl.when(start_row + row_tile > rows)           # partial / clamped tile
    def _():
        valid = rows - start_row                    # may be <= 0
        row_ids = jax.lax.broadcasted_iota(jnp.int32, sq.shape, 0)
        # select (not multiply-by-mask) so garbage/NaN in OOB lanes cannot leak
        out_ref[...] += _fold_rows(jnp.where(row_ids < valid, sq, 0.0))


@jax.jit
def _mse_flat(pred, gt):
    n_elem = pred.size
    itemsize = jnp.dtype(pred.dtype).itemsize

    flat_p = pred.reshape(-1)
    flat_g = gt.reshape(-1)

    rem = n_elem % LANE
    if rem:
        # Rare: pad only to the next lane multiple (<=127 zeros, contribute 0).
        pad = LANE - rem
        flat_p = jnp.pad(flat_p, (0, pad))
        flat_g = jnp.pad(flat_g, (0, pad))

    rows = flat_p.size // LANE
    p2d = flat_p.reshape(rows, LANE)
    g2d = flat_g.reshape(rows, LANE)

    num_cores, max_row_tile, extra_buf = _tpu_defaults()

    # Sublane granularity by packing: f32 -> 8, bf16 -> 16, int8/fp8 -> 32.
    sublane = max(8, 32 // max(itemsize, 1))
    row_tile = min(max_row_tile, _round_up(rows, sublane))

    n_tiles = pl.cdiv(rows, row_tile)
    if n_tiles < 2:
        num_cores = 1
    tiles_per_core = pl.cdiv(n_tiles, num_cores)

    kernel = functools.partial(_mse_flat_kernel, rows=rows, row_tile=row_tile,
                               tiles_per_core=tiles_per_core)

    def in_map(c, k):
        # Clamp so over-provisioned steps (odd tile count on the 2-core split)
        # never DMA out of range; their contribution is zero-masked in-kernel.
        return (jnp.minimum(c * tiles_per_core + k, n_tiles - 1), 0)

    in_spec = _make_in_spec((row_tile, LANE), in_map, extra_buf)

    n_in_bufs = 3 if extra_buf else 2
    vmem_est = 2 * n_in_bufs * row_tile * LANE * itemsize \
        + 2 * num_cores * OUT_SUBLANES * LANE * 4
    cp_kwargs = dict(dimension_semantics=("parallel", "arbitrary"))
    # TODO(synk): on v7x verify "parallel" actually shards axis 0 across the
    # two TensorCores; if not, switch to pltpu.CORE_PARALLEL for that axis.
    if vmem_est > (8 << 20):
        cp_kwargs["vmem_limit_bytes"] = int(vmem_est + (4 << 20))

    out = pl.pallas_call(
        kernel,
        out_shape=jax.ShapeDtypeStruct(
            (num_cores * OUT_SUBLANES, LANE), jnp.float32),
        grid_spec=pltpu.PrefetchScalarGridSpec(
            num_scalar_prefetch=0,
            grid=(num_cores, tiles_per_core),
            in_specs=[in_spec, in_spec],
            out_specs=pl.BlockSpec((OUT_SUBLANES, LANE), lambda c, k: (c, 0)),
        ),
        compiler_params=pltpu.CompilerParams(**cp_kwargs),
        cost_estimate=pl.CostEstimate(
            flops=3 * n_elem,
            transcendentals=0,
            bytes_accessed=2 * n_elem * itemsize
            + num_cores * OUT_SUBLANES * LANE * 4,
        ),
    )(p2d, g2d)

    # out holds per-core (8,128) partial-sum blocks; combine on host.
    return jnp.sum(out) / jnp.float32(n_elem)


# ---------------------------------------------------------------------------
# Fused strong-supervision MSE kernel: batch indices via scalar prefetch.
# ---------------------------------------------------------------------------
def _mse_gather_kernel(idx_ref, pred_ref, gt_ref, out_ref, *, rows_per_batch,
                       row_tile):
    del idx_ref  # only used by the index_maps
    s = pl.program_id(0)   # selected-batch index
    k = pl.program_id(1)   # row tile within the batch

    @pl.when(jnp.logical_and(s == 0, k == 0))
    def _():
        out_ref[...] = jnp.zeros_like(out_ref)

    d = pred_ref[0].astype(jnp.float32) - gt_ref[0].astype(jnp.float32)
    sq = d * d

    start_row = k * row_tile

    @pl.when(start_row + row_tile <= rows_per_batch)   # full tile: no mask
    def _():
        out_ref[...] += _fold_rows(sq)

    @pl.when(start_row + row_tile > rows_per_batch)    # ragged last tile
    def _():
        valid = rows_per_batch - start_row
        row_ids = jax.lax.broadcasted_iota(jnp.int32, sq.shape, 0)
        out_ref[...] += _fold_rows(jnp.where(row_ids < valid, sq, 0.0))


@jax.jit
def _mse_gather(pred, gt, idx):
    b = pred.shape[0]
    per_batch = int(np.prod(pred.shape[1:]))
    rows_per_batch = per_batch // LANE
    itemsize = jnp.dtype(pred.dtype).itemsize

    p3d = pred.reshape(b, rows_per_batch, LANE)
    g3d = gt.reshape(b, rows_per_batch, LANE)

    _, max_row_tile, extra_buf = _tpu_defaults()
    sublane = max(8, 32 // max(itemsize, 1))
    row_tile = min(max_row_tile, _round_up(rows_per_batch, sublane))
    tiles_per_batch = pl.cdiv(rows_per_batch, row_tile)
    num_sel = idx.shape[0]

    kernel = functools.partial(_mse_gather_kernel,
                               rows_per_batch=rows_per_batch,
                               row_tile=row_tile)

    # Scalar-prefetched indices drive data-dependent block selection: the
    # kernel streams only the selected batches (no XLA gather / extra HBM pass).
    def in_map(s, k, idx_ref):
        return (idx_ref[s], k, 0)

    in_spec = _make_in_spec((1, row_tile, LANE), in_map, extra_buf)

    out = pl.pallas_call(
        kernel,
        out_shape=jax.ShapeDtypeStruct((OUT_SUBLANES, LANE), jnp.float32),
        grid_spec=pltpu.PrefetchScalarGridSpec(
            num_scalar_prefetch=1,
            grid=(num_sel, tiles_per_batch),
            in_specs=[in_spec, in_spec],
            out_specs=pl.BlockSpec((OUT_SUBLANES, LANE),
                                   lambda s, k, idx_ref: (0, 0)),
        ),
        compiler_params=pltpu.CompilerParams(
            dimension_semantics=("arbitrary", "arbitrary")),
        cost_estimate=pl.CostEstimate(
            flops=3 * num_sel * per_batch,
            transcendentals=0,
            bytes_accessed=2 * num_sel * per_batch * itemsize
            + OUT_SUBLANES * LANE * 4,
        ),
    )(idx, p3d, g3d)

    return jnp.sum(out) / jnp.float32(num_sel * per_batch)


# ---------------------------------------------------------------------------
# Public API (matches SegmentationLoss.forward semantics).
# ---------------------------------------------------------------------------
def mse_loss_pallas(pred, gt):
    """Mean squared error between two equal-shape arrays via a Pallas kernel."""
    assert pred.shape == gt.shape, (pred.shape, gt.shape)
    return _mse_flat(pred, gt)


def segmentation_loss(segmap_pred, segmap_gt, strong_supervision=None):
    """JAX/Pallas equivalent of SegmentationLoss.forward."""
    if strong_supervision is None:
        return _mse_flat(segmap_pred, segmap_gt)

    strong = jnp.asarray(strong_supervision)
    if strong.dtype == jnp.bool_:
        # TODO(synk): boolean-mask selection has a data-dependent size; gather
        # eagerly on the host and run the flat streaming kernel.
        return _mse_flat(segmap_pred[strong], segmap_gt[strong])

    per_batch = int(np.prod(segmap_pred.shape[1:]))
    if strong.ndim == 1 and per_batch % LANE == 0:
        return _mse_gather(segmap_pred, segmap_gt, strong.astype(jnp.int32))

    # Fallback: host-side gather + flat streaming kernel.
    return _mse_flat(segmap_pred[strong], segmap_gt[strong])


if __name__ == "__main__":
    key = jax.random.PRNGKey(0)
    k1, k2, k3, k4 = jax.random.split(key, 4)

    # Case 1: small NCHW maps, no strong supervision.
    B, C, H, W = 2, 4, 16, 16
    segmap_pred = jax.random.normal(k1, (B, C, H, W), dtype=jnp.float32)
    segmap_gt = jax.random.normal(k2, (B, C, H, W), dtype=jnp.float32)
    loss = jax.block_until_ready(segmentation_loss(segmap_pred, segmap_gt))
    ref = jnp.mean((segmap_pred - segmap_gt) ** 2)
    assert jnp.allclose(loss, ref, atol=1e-5, rtol=1e-5), (loss, ref)

    # Case 2: strong supervision (fused scalar-prefetch gather path).
    strong = jnp.array([0], dtype=jnp.int32)
    loss2 = jax.block_until_ready(
        segmentation_loss(segmap_pred, segmap_gt, strong_supervision=strong))
    ref2 = jnp.mean((segmap_pred[strong] - segmap_gt[strong]) ** 2)
    assert jnp.allclose(loss2, ref2, atol=1e-5, rtol=1e-5), (loss2, ref2)

    # Case 2b: multiple selected batches, out of order.
    strong_b = jnp.array([1, 0], dtype=jnp.int32)
    loss2b = jax.block_until_ready(
        segmentation_loss(segmap_pred, segmap_gt, strong_supervision=strong_b))
    ref2b = jnp.mean((segmap_pred[strong_b] - segmap_gt[strong_b]) ** 2)
    assert jnp.allclose(loss2b, ref2b, atol=1e-5, rtol=1e-5), (loss2b, ref2b)

    # Case 3: non-lane-aligned size exercises the ragged-tail mask path.
    a = jax.random.normal(k3, (2, 3, 10, 10), dtype=jnp.float32)
    b = jax.random.normal(k4, (2, 3, 10, 10), dtype=jnp.float32)
    loss3 = jax.block_until_ready(mse_loss_pallas(a, b))
    ref3 = jnp.mean((a - b) ** 2)
    assert jnp.allclose(loss3, ref3, atol=1e-5, rtol=1e-5), (loss3, ref3)

    # Case 3b: strong supervision with non-lane-aligned batches -> fallback.
    loss3b = jax.block_until_ready(
        segmentation_loss(a, b, strong_supervision=jnp.array([1], jnp.int32)))
    ref3b = jnp.mean((a[1:] - b[1:]) ** 2)
    assert jnp.allclose(loss3b, ref3b, atol=1e-5, rtol=1e-5), (loss3b, ref3b)

    # Case 4: multi-tile accumulation with a partial last tile.
    c1 = jax.random.normal(k1, (6, 4, 128, 128), dtype=jnp.float32)  # rows=3072
    c2 = jax.random.normal(k2, (6, 4, 128, 128), dtype=jnp.float32)
    loss4 = jax.block_until_ready(mse_loss_pallas(c1, c2))
    ref4 = jnp.mean((c1 - c2) ** 2)
    assert jnp.allclose(loss4, ref4, atol=1e-5, rtol=1e-5), (loss4, ref4)

    # Case 5: larger slab (rows=8192) -> multiple tiles on every generation and
    # the 2-way core split on v7x.
    d1 = jax.random.normal(k3, (2, 8, 256, 256), dtype=jnp.float32)
    d2 = jax.random.normal(k4, (2, 8, 256, 256), dtype=jnp.float32)
    loss5 = jax.block_until_ready(mse_loss_pallas(d1, d2))
    ref5 = jnp.mean((d1 - d2) ** 2)
    assert jnp.allclose(loss5, ref5, atol=1e-5, rtol=1e-5), (loss5, ref5)

    print("KERNEL_OK")
</pallas_src>

<mosaic_0001>
module attributes {stable_mosaic.version = 11 : i64} {
  func.func @_mse_flat_kernel(%arg0: i32, %arg1: i32, %arg2: memref<16x128xf32, #tpu.memory_space<vmem>>, %arg3: memref<16x128xf32, #tpu.memory_space<vmem>>, %arg4: memref<8x128xf32, #tpu.memory_space<vmem>>) attributes {dimension_semantics = [#tpu.dimension_semantics<parallel>, #tpu.dimension_semantics<arbitrary>], iteration_bounds = array<i64: 1, 1>, scalar_prefetch = 0 : i64, scratch_operands = 0 : i64, tpu.core_type = #tpu.core_type<tc>, window_params = [{transform_indices = @transform_0, window_bounds = array<i64: 16, 128>}, {transform_indices = @transform_1, window_bounds = array<i64: 16, 128>}, {transform_indices = @transform_2, window_bounds = array<i64: 8, 128>}]} {
    %c0_i32 = arith.constant 0 : i32
    %0 = arith.cmpi eq, %arg1, %c0_i32 : i32
    %1 = arith.extui %0 : i1 to i32
    %c0_i32_0 = arith.constant 0 : i32
    %2 = arith.cmpi ne, %1, %c0_i32_0 : i32
    scf.if %2 {
      %cst = arith.constant 0.000000e+00 : f32
      %18 = vector.broadcast %cst : f32 to vector<8x128xf32>
      %c0_10 = arith.constant 0 : index
      %c0_11 = arith.constant 0 : index
      %19 = vector.load %arg4[%c0_10, %c0_11] : memref<8x128xf32, #tpu.memory_space<vmem>>, vector<8x128xf32>
      tpu.vector_store %arg4[%c0_10, %c0_11], %18 {strides = array<i32>} : memref<8x128xf32, #tpu.memory_space<vmem>>, vector<8x128xf32>,
    } else {
    }
    %c0 = arith.constant 0 : index
    %c0_1 = arith.constant 0 : index
    %3 = vector.load %arg2[%c0, %c0_1] : memref<16x128xf32, #tpu.memory_space<vmem>>, vector<16x128xf32>
    %c0_2 = arith.constant 0 : index
    %c0_3 = arith.constant 0 : index
    %4 = vector.load %arg3[%c0_2, %c0_3] : memref<16x128xf32, #tpu.memory_space<vmem>>, vector<16x128xf32>
    %5 = arith.subf %3, %4 : vector<16x128xf32>
    %6 = arith.mulf %5, %5 : vector<16x128xf32>
    %c1_i32 = arith.constant 1 : i32
    %7 = arith.muli %arg0, %c1_i32 : i32
    %8 = arith.addi %7, %arg1 : i32
    %c16_i32 = arith.constant 16 : i32
    %9 = arith.muli %8, %c16_i32 : i32
    %c16_i32_4 = arith.constant 16 : i32
    %10 = arith.addi %9, %c16_i32_4 : i32
    %c16_i32_5 = arith.constant 16 : i32
    %11 = arith.cmpi sle, %10, %c16_i32_5 : i32
    %12 = arith.extui %11 : i1 to i32
    %c0_i32_6 = arith.constant 0 : i32
    %13 = arith.cmpi ne, %12, %c0_i32_6 : i32
    scf.if %13 {
      %c0_10 = arith.constant 0 : index
      %c0_11 = arith.constant 0 : index
      %18 = vector.load %arg4[%c0_10, %c0_11] : memref<8x128xf32, #tpu.memory_space<vmem>>, vector<8x128xf32>
      %19 = vector.shape_cast %6 : vector<16x128xf32> to vector<2x8x128xf32>
      %cst = arith.constant dense<0.000000e+00> : vector<8x128xf32>
      %20 = vector.multi_reduction <add>, %19, %cst [0] : vector<2x8x128xf32> to vector<8x128xf32>
      %21 = arith.addf %18, %20 : vector<8x128xf32>
      %c0_12 = arith.constant 0 : index
      %c0_13 = arith.constant 0 : index
      %22 = vector.load %arg4[%c0_12, %c0_13] : memref<8x128xf32, #tpu.memory_space<vmem>>, vector<8x128xf32>
      tpu.vector_store %arg4[%c0_12, %c0_13], %21 {strides = array<i32>} : memref<8x128xf32, #tpu.memory_space<vmem>>, vector<8x128xf32>,
    } else {
    }
    %c16_i32_7 = arith.constant 16 : i32
    %14 = arith.addi %9, %c16_i32_7 : i32
    %c16_i32_8 = arith.constant 16 : i32
    %15 = arith.cmpi sgt, %14, %c16_i32_8 : i32
    %16 = arith.extui %15 : i1 to i32
    %c0_i32_9 = arith.constant 0 : i32
    %17 = arith.cmpi ne, %16, %c0_i32_9 : i32
    scf.if %17 {
      %c16_i32_10 = arith.constant 16 : i32
      %18 = arith.subi %c16_i32_10, %9 : i32
      %19 = tpu.iota {dimensions = array<i32: 0>} : vector<16x128xi32>
      %c0_11 = arith.constant 0 : index
      %c0_12 = arith.constant 0 : index
      %20 = vector.load %arg4[%c0_11, %c0_12] : memref<8x128xf32, #tpu.memory_space<vmem>>, vector<8x128xf32>
      %21 = vector.broadcast %18 : i32 to vector<16x128xi32>
      %22 = arith.cmpi slt, %19, %21 : vector<16x128xi32>
      %cst = arith.constant 0.000000e+00 : f32
      %23 = vector.broadcast %cst : f32 to vector<16x128xf32>
      %24 = arith.select %22, %6, %23 : vector<16x128xi1>, vector<16x128xf32>
      %25 = vector.shape_cast %24 : vector<16x128xf32> to vector<2x8x128xf32>
      %cst_13 = arith.constant dense<0.000000e+00> : vector<8x128xf32>
      %26 = vector.multi_reduction <add>, %25, %cst_13 [0] : vector<2x8x128xf32> to vector<8x128xf32>
      %27 = arith.addf %20, %26 : vector<8x128xf32>
      %c0_14 = arith.constant 0 : index
      %c0_15 = arith.constant 0 : index
      %28 = vector.load %arg4[%c0_14, %c0_15] : memref<8x128xf32, #tpu.memory_space<vmem>>, vector<8x128xf32>
      tpu.vector_store %arg4[%c0_14, %c0_15], %27 {strides = array<i32>} : memref<8x128xf32, #tpu.memory_space<vmem>>, vector<8x128xf32>,
    } else {
    }
    return
  }
  func.func @transform_0(%arg0: i32, %arg1: i32) -> (i32, i32) {
    %c1_i32 = arith.constant 1 : i32
    %0 = arith.muli %arg0, %c1_i32 : i32
    %1 = arith.addi %0, %arg1 : i32
    %c0_i32 = arith.constant 0 : i32
    %2 = arith.minsi %1, %c0_i32 : i32
    %c0_i32_0 = arith.constant 0 : i32
    %c0_i32_1 = arith.constant 0 : i32
    return %2, %c0_i32_0 : i32, i32
  }
  func.func @transform_1(%arg0: i32, %arg1: i32) -> (i32, i32) {
    %c1_i32 = arith.constant 1 : i32
    %0 = arith.muli %arg0, %c1_i32 : i32
    %1 = arith.addi %0, %arg1 : i32
    %c0_i32 = arith.constant 0 : i32
    %2 = arith.minsi %1, %c0_i32 : i32
    %c0_i32_0 = arith.constant 0 : i32
    %c0_i32_1 = arith.constant 0 : i32
    return %2, %c0_i32_0 : i32, i32
  }
  func.func @transform_2(%arg0: i32, %arg1: i32) -> (i32, i32) {
    %c0_i32 = arith.constant 0 : i32
    %c0_i32_0 = arith.constant 0 : i32
    return %arg0, %c0_i32 : i32, i32
  }
}

</mosaic_0001>

<llo_original>
// kernel: _mse_flat.1
$region0: #{_mse_flat.1}
  #allocation0 [shape = 'u32[]', space=smem, size = 0x4, offset = 0x4, fixed_abs, tag = 'smem constant byte address 0x4 - core index']
  #allocation1 [shape = 'u32[144,128]{1,0:T(1,128)}', space=vmem, size = 0x12000, scoped, tag = 'internal scratch']
  %s0 = inlined_call_operand.vmem [shape: f32[16,128], index: 0, kind: input, shape index: {}]
  %s1 = inlined_call_operand.vmem [shape: f32[16,128], index: 1, kind: input, shape index: {}]
  %s2 = inlined_call_operand.vmem [shape: f32[8,128], index: 2, kind: output, shape index: {}]
  %s3 = sld [smem:[#allocation0]]
  $region30: #{_mse_flat.1} parent=0
    _
  %s5 = ssub.s32 1, %s3
  %s6 = scalar_select 0, %s5, %s3
  // Predicated region
  $region2: #{_mse_flat.1} parent=0 // pred_check
    _
  $region3: #{_mse_flat.1} parent=0 // pred_check_branch
    %8 = sbr.rel (0) target = $region5
  $region4: #{_mse_flat.1} parent=0 // pred_region
    %s9 = sadd.s32 0, 0
    %p10 = scmp.lt.s32.totalorder %s9, 0
    %s11 = scalar_select %p10, %s9, 0
    %s12 = smul.u32 2, %s11
    %p13 = scmp.lt.s32.totalorder %s12, 1
    %s14 = scalar_select %p13, %s12, 1
    %s15 = smul.addr %s14, 8
    %s16 = scalar_lea.vmem %s0, %s15
    %s17 = sadd.s32 0, 0
    %p18 = scmp.lt.s32.totalorder %s17, 0
    %s19 = scalar_select %p18, %s17, 0
    %s20 = smul.u32 2, %s19
  $region5: #{_mse_flat.1} parent=0 // pred_fallthru
    _
  // Predicated region
  $region6: #{_mse_flat.1} parent=0 // pred_check
    _
  $region7: #{_mse_flat.1} parent=0 // pred_check_branch
    %22 = sbr.rel (0) target = $region9
  $region8: #{_mse_flat.1} parent=0 // pred_region
    %s23 = sadd.s32 0, 0
    %p24 = scmp.lt.s32.totalorder %s23, 0
    %s25 = scalar_select %p24, %s23, 0
    %s26 = smul.u32 2, %s25
    %p27 = scmp.lt.s32.totalorder %s26, 1
    %s28 = scalar_select %p27, %s26, 1
    %s29 = smul.addr %s28, 8
    %s30 = scalar_lea.vmem %s1, %s29
    %s31 = sadd.s32 0, 0
    %p32 = scmp.lt.s32.totalorder %s31, 0
    %s33 = scalar_select %p32, %s31, 0
    %s34 = smul.u32 2, %s33
  $region9: #{_mse_flat.1} parent=0 // pred_fallthru
    _
  %s35 = sadd.s32 0, 0
  %p36 = scmp.lt.s32.totalorder %s35, 0
  %s37 = scalar_select %p36, %s35, 0
  %s38 = smul.u32 2, %s37
  %p39 = scmp.lt.s32.totalorder %s38, 1
  %s40 = scalar_select %p39, %s38, 1
  %s41 = smul.addr %s40, 8
  %s42 = scalar_lea.vmem %s0, %s41
  %s43 = sadd.s32 0, 0
  %p44 = scmp.lt.s32.totalorder %s43, 0
  %s45 = scalar_select %p44, %s43, 0
  %s46 = smul.u32 2, %s45
  %p47 = scmp.lt.s32.totalorder %s46, 1
  %s48 = scalar_select %p47, %s46, 1
  %s49 = smul.addr %s48, 8
  %s50 = scalar_lea.vmem %s1, %s49
  %s51 = sadd.s32 0, 0
  %p52 = scmp.lt.s32.totalorder %s51, 0
  %s53 = scalar_select %p52, %s51, 0
  %s54 = smul.u32 2, %s53
  %p55 = scmp.lt.s32.totalorder %s54, 1
  %s56 = scalar_select %p55, %s54, 1
  %s57 = smul.addr %s56, 8
  %s58 = scalar_lea.vmem %s0, %s57
  %s59 = sadd.s32 0, 0
  %p60 = scmp.lt.s32.totalorder %s59, 0
  %s61 = scalar_select %p60, %s59, 0
  %s62 = smul.u32 2, %s61
  %s63 = sadd.s32 0, 0
  %p64 = scmp.lt.s32.totalorder %s63, 0
  %s65 = scalar_select %p64, %s63, 0
  %s66 = smul.u32 2, %s65
  %p67 = scmp.lt.s32.totalorder %s66, 1
  %s68 = scalar_select %p67, %s66, 1
  %s69 = smul.addr %s68, 8
  %s70 = scalar_lea.vmem %s1, %s69
  %s71 = sadd.s32 0, 0
  %p72 = scmp.lt.s32.totalorder %s71, 0
  %s73 = scalar_select %p72, %s71, 0
  %s74 = smul.u32 2, %s73
  %p75 = scmp.eq.s32.totalorder 0, 0
  // Predicated region
  $region10: #{_mse_flat.1} parent=0 // pred_check
    %p76 = pneg %p75
  $region11: #{_mse_flat.1} parent=0 // pred_check_branch
    %78 = sbr.rel (%p76) target = $region13
  $region12: #{_mse_flat.1} parent=0 // pred_region
    %79 = vst [vmem:[%s2] sm:$0xff] 0.0
  $region13: #{_mse_flat.1} parent=0 // pred_fallthru
    _
  %v80 = vld [vmem:[%s58] sm:$0xff]
  %v81 = vld [vmem:[%s58 + $0x8] sm:$0xff]
  %v82 = vld [vmem:[%s70] sm:$0xff]
  %v83 = vld [vmem:[%s70 + $0x8] sm:$0xff]
  %v84 = vsub.f32 %v80, %v82
  %v85 = vsub.f32 %v81, %v83
  %v86 = vmul.f32 %v84, %v84
  %v87 = vmul.f32 %v85, %v85
  %s88 = sadd.s32 0, 0
  %s89 = smul.u32 %s88, 16
  %s90 = sadd.s32 %s89, 16
  %p91 = scmp.le.s32.totalorder %s90, 16
  // Predicated region
  $region14: #{_mse_flat.1} parent=0 // pred_check
    %p92 = pneg %p91
  $region15: #{_mse_flat.1} parent=0 // pred_check_branch
    %94 = sbr.rel (%p92) target = $region17
  $region16: #{_mse_flat.1} parent=0 // pred_region
    %v95 = vld [vmem:[%s2] sm:$0xff]
    %v96 = vadd.f32 %v86, %v87
    %v97 = vadd.f32 %v95, %v96
    %98 = vst [vmem:[%s2] sm:$0xff] %v97
  $region17: #{_mse_flat.1} parent=0 // pred_fallthru
    _
  %p99 = scmp.gt.s32.totalorder %s90, 16
  // Predicated region
  $region18: #{_mse_flat.1} parent=0 // pred_check
    %p100 = pneg %p99
  $region19: #{_mse_flat.1} parent=0 // pred_check_branch
    %102 = sbr.rel (%p100) target = $region21
  $region20: #{_mse_flat.1} parent=0 // pred_region
    %s103 = ssub.s32 16, %s89
    %v104 = vlaneseq
    %v105 = vshrl.u32 %v104, 7
    %v106 = vadd.s32 %v105, 8
    %v107 = vld [vmem:[%s2] sm:$0xff]
    %v108 = vstv %s103
    %vm109 = vcmp.lt.s32.totalorder %v105, %v108
    %vm110 = vcmp.lt.s32.totalorder %v106, %v108
    %v111 = vsel %vm109, %v86, 0.0
    %v112 = vsel %vm110, %v87, 0.0
    %v113 = vadd.f32 %v111, %v112
    %v114 = vadd.f32 %v107, %v113
    %115 = vst [vmem:[%s2] sm:$0xff] %v114
  $region21: #{_mse_flat.1} parent=0 // pred_fallthru
    _
  // Predicated region
  $region22: #{_mse_flat.1} parent=0 // pred_check
    _
  $region23: #{_mse_flat.1} parent=0 // pred_check_branch
    %117 = sbr.rel (0) target = $region25
  $region24: #{_mse_flat.1} parent=0 // pred_region
    _
  $region25: #{_mse_flat.1} parent=0 // pred_fallthru
    _
  // Predicated region
  $region26: #{_mse_flat.1} parent=0 // pred_check
    _
  $region27: #{_mse_flat.1} parent=0 // pred_check_branch
    %119 = sbr.rel (0) target = $region29
  $region28: #{_mse_flat.1} parent=0 // pred_region
    _
  $region29: #{_mse_flat.1} parent=0 // pred_fallthru
    _

</llo_original>
